<compile_context>
chip_gen: v5e
topology: v5e:2x2
jax: 0.10.0
libtpu: 0.0.40
codegen_flags: <defaults>
</compile_context>

<pallas_src>
import math

import jax
import jax.numpy as jnp
from jax import lax
from jax.experimental import pallas as pl
from jax.experimental.pallas import tpu as pltpu

_CONTRACT_LAST = (((1,), (1,)), ((), ()))  # contract last dim of both operands


def _softplus(z):
    # Numerically stable softplus.
    return jnp.maximum(z, 0.0) + jnp.log1p(jnp.exp(-jnp.abs(z)))


def _mlp_head(h1, w2_ref, w3_ref):
    """(1, 64) -> relu(@W2.T) -> @W3.T -> softplus -> (1, 1)."""
    h2 = jnp.maximum(
        lax.dot_general(h1, w2_ref[...], _CONTRACT_LAST,
                        preferred_element_type=jnp.float32),
        0.0,
    )
    z = lax.dot_general(h2, w3_ref[...], _CONTRACT_LAST,
                        preferred_element_type=jnp.float32)
    return _softplus(z)


def _meta_loss_kernel_single(x_ref, w1_ref, w2_ref, w3_ref, o_ref):
    """Whole forward pass in one grid step (no accumulator / phases)."""
    h1 = jnp.maximum(
        lax.dot_general(x_ref[...], w1_ref[...], _CONTRACT_LAST,
                        preferred_element_type=jnp.float32),
        0.0,
    )
    o_ref[...] = _mlp_head(h1, w2_ref, w3_ref)


def _meta_loss_kernel_tiled(x_ref, w1_ref, w2_ref, w3_ref, o_ref, h1_acc):
    """Grid axis 0 tiles the reduction over the flattened input dimension."""
    k = pl.program_id(0)

    @pl.when(k == 0)
    def _():
        h1_acc[...] = jnp.zeros_like(h1_acc)

    # Partial (1, tk) . (64, tk)^T -> (1, 64), accumulated in f32.
    h1_acc[...] += lax.dot_general(
        x_ref[...], w1_ref[...], _CONTRACT_LAST,
        preferred_element_type=jnp.float32,
    )

    @pl.when(k == pl.num_programs(0) - 1)
    def _():
        h1 = jnp.maximum(h1_acc[...], 0.0)
        o_ref[...] = _mlp_head(h1, w2_ref, w3_ref)


def meta_loss_forward(pred, y, w1, w2, w3, *, tk_cap=32768,
                      stream_dtype=jnp.float32):
    """MetaLoss forward.

    pred, y : NCHW arrays (any float dtype), concatenated along channels and
              flattened row-major exactly like the PyTorch module.
    w1      : (64, in_)  w2 : (32, 64)  w3 : (1, 32)   (PyTorch Linear layout)
    tk_cap  : max K tile (multiple of 128); default keeps the double-buffered
              W1 working set ~16 MiB, safe on v5e/v6e (128 MiB) and v7x (64 MiB).
    stream_dtype : dtype used to stream x / W1 (f32 default; bf16 halves the
              dominant HBM read at a small accuracy cost).
    """
    assert tk_cap % 128 == 0 and tk_cap > 0

    # cat along channel dim, row-major flatten -> (1, in_)  (matches torch).
    x = jnp.concatenate((pred, y), axis=1).reshape(1, -1)
    in_ = x.shape[1]

    x = x.astype(stream_dtype)
    w1 = w1.astype(stream_dtype)          # (64, in_)  -- lane-dense tiles
    w2 = w2.astype(jnp.float32)           # (32, 64)   -- tiny, resident
    w3 = w3.astype(jnp.float32)           # (1, 32)    -- tiny, resident

    # Choose the K tile: one step if the (128-aligned) reduction fits under the
    # cap, else the largest lane-aligned tile <= tk_cap.
    in_pad128 = ((in_ + 127) // 128) * 128
    tk = min(in_pad128, tk_cap)
    padded = ((in_ + tk - 1) // tk) * tk
    if padded != in_:
        # Zero columns contribute nothing to the matvec -> numerics unchanged.
        x = jnp.pad(x, ((0, 0), (0, padded - in_)))
        w1 = jnp.pad(w1, ((0, 0), (0, padded - in_)))
    grid_k = padded // tk

    # VMEM budget: double-buffered (64, tk) W1 tile + (1, tk) x tile + headroom.
    itemsize = jnp.dtype(stream_dtype).itemsize
    hot_bytes = 2 * (64 * tk + tk) * itemsize
    vmem_limit = int(min(max(int(hot_bytes * 1.5) + (2 << 20), 16 << 20),
                         96 << 20))

    out_shape = jax.ShapeDtypeStruct((1, 1), jnp.float32)

    if grid_k == 1:
        # Single-step path: no accumulator scratch, no phases.
        out = pl.pallas_call(
            _meta_loss_kernel_single,
            out_shape=out_shape,
            grid_spec=pltpu.PrefetchScalarGridSpec(
                num_scalar_prefetch=0,
                grid=(1,),
                in_specs=[
                    pl.BlockSpec((1, tk), lambda k: (0, 0)),   # x (full)
                    pl.BlockSpec((64, tk), lambda k: (0, 0)),  # W1 (full)
                    pl.BlockSpec((32, 64), lambda k: (0, 0)),  # W2
                    pl.BlockSpec((1, 32), lambda k: (0, 0)),   # W3
                ],
                out_specs=pl.BlockSpec((1, 1), lambda k: (0, 0)),
            ),
            compiler_params=pltpu.CompilerParams(
                dimension_semantics=("arbitrary",),
                vmem_limit_bytes=vmem_limit,
            ),
        )(x, w1, w2, w3)
    else:
        # Tiled reduction over K with an f32 (1, 64) accumulator.
        out = pl.pallas_call(
            _meta_loss_kernel_tiled,
            out_shape=out_shape,
            grid_spec=pltpu.PrefetchScalarGridSpec(
                num_scalar_prefetch=0,
                grid=(grid_k,),
                in_specs=[
                    pl.BlockSpec((1, tk), lambda k: (0, k)),    # x chunk
                    pl.BlockSpec((64, tk), lambda k: (0, k)),   # W1 chunk (lane-dense)
                    pl.BlockSpec((32, 64), lambda k: (0, 0)),   # W2 (resident)
                    pl.BlockSpec((1, 32), lambda k: (0, 0)),    # W3 (resident)
                ],
                out_specs=pl.BlockSpec((1, 1), lambda k: (0, 0)),
                scratch_shapes=[pltpu.VMEM((1, 64), jnp.float32)],
            ),
            compiler_params=pltpu.CompilerParams(
                dimension_semantics=("arbitrary",),
                vmem_limit_bytes=vmem_limit,
            ),
        )(x, w1, w2, w3)

    return out[0, 0]


def _xavier_uniform(key, shape):
    # nn.init.xavier_uniform_ with gain=1.0; Linear weight shape is (out, in).
    fan_out, fan_in = shape
    bound = math.sqrt(6.0 / (fan_in + fan_out))
    return jax.random.uniform(key, shape, jnp.float32, -bound, bound)


def _reference(pred, y, w1, w2, w3):
    x = jnp.concatenate((pred, y), axis=1).reshape(-1)
    h = jnp.maximum(x @ w1.T, 0.0)
    h = jnp.maximum(h @ w2.T, 0.0)
    z = h @ w3.T
    return jnp.mean(jax.nn.softplus(z))


if __name__ == "__main__":
    key = jax.random.PRNGKey(0)
    kp, ky, k1, k2, k3, kp2, ky2, k1b = jax.random.split(key, 8)

    # Small shapes: pred, y of (2, 4, 16, 16) -> cat -> (2, 8, 16, 16)
    # -> flatten -> in_ = 4096.
    pred = jax.random.normal(kp, (2, 4, 16, 16), jnp.float32)
    y = jax.random.normal(ky, (2, 4, 16, 16), jnp.float32)
    in_ = pred.size + y.size  # 4096

    w1 = _xavier_uniform(k1, (64, in_))
    w2 = _xavier_uniform(k2, (32, 64))
    w3 = _xavier_uniform(k3, (1, 32))

    # 1) Default path: whole reduction collapses to a single grid step.
    out_single = jax.block_until_ready(meta_loss_forward(pred, y, w1, w2, w3))
    ref = _reference(pred, y, w1, w2, w3)
    assert jnp.allclose(out_single, ref, rtol=1e-4, atol=1e-4), (out_single, ref)

    # 2) Force the tiled-reduction path (grid of 4 K-tiles) on the same data.
    out_tiled = jax.block_until_ready(
        meta_loss_forward(pred, y, w1, w2, w3, tk_cap=1024))
    assert jnp.allclose(out_tiled, ref, rtol=1e-4, atol=1e-4), (out_tiled, ref)

    # 3) Non-128-divisible in_ exercises the zero-padding path.
    pred2 = jax.random.normal(kp2, (1, 3, 10, 10), jnp.float32)
    y2 = jax.random.normal(ky2, (1, 3, 10, 10), jnp.float32)
    in2 = pred2.size + y2.size  # 600 -> padded to 640
    w1b = _xavier_uniform(k1b, (64, in2))
    out_pad = jax.block_until_ready(meta_loss_forward(pred2, y2, w1b, w2, w3))
    ref2 = _reference(pred2, y2, w1b, w2, w3)
    assert jnp.allclose(out_pad, ref2, rtol=1e-4, atol=1e-4), (out_pad, ref2)

    print("KERNEL_OK")
</pallas_src>

<mosaic_0001>
module attributes {stable_mosaic.version = 11 : i64} {
  func.func @_meta_loss_kernel_single(%arg0: i32, %arg1: memref<1x4096xf32, #tpu.memory_space<vmem>>, %arg2: memref<64x4096xf32, #tpu.memory_space<vmem>>, %arg3: memref<32x64xf32, #tpu.memory_space<vmem>>, %arg4: memref<1x32xf32, #tpu.memory_space<vmem>>, %arg5: memref<1x1xf32, #tpu.memory_space<vmem>>) attributes {dimension_semantics = [#tpu.dimension_semantics<arbitrary>], iteration_bounds = array<i64: 1>, scalar_prefetch = 0 : i64, scratch_operands = 0 : i64, tpu.core_type = #tpu.core_type<tc>, window_params = [{pipeline_mode = #tpu.pipeline_mode<synchronous>, transform_indices = @transform_0, window_bounds = array<i64: 1, 4096>}, {pipeline_mode = #tpu.pipeline_mode<synchronous>, transform_indices = @transform_1, window_bounds = array<i64: 64, 4096>}, {pipeline_mode = #tpu.pipeline_mode<synchronous>, transform_indices = @transform_2, window_bounds = array<i64: 32, 64>}, {pipeline_mode = #tpu.pipeline_mode<synchronous>, transform_indices = @transform_3, window_bounds = array<i64: 1, 32>}, {pipeline_mode = #tpu.pipeline_mode<synchronous>, transform_indices = @transform_4, window_bounds = array<i64: 1, 1>}]} {
    %c0 = arith.constant 0 : index
    %c0_0 = arith.constant 0 : index
    %0 = vector.load %arg1[%c0, %c0_0] : memref<1x4096xf32, #tpu.memory_space<vmem>>, vector<1x4096xf32>
    %c0_1 = arith.constant 0 : index
    %c0_2 = arith.constant 0 : index
    %1 = vector.load %arg2[%c0_1, %c0_2] : memref<64x4096xf32, #tpu.memory_space<vmem>>, vector<64x4096xf32>
    %cst = arith.constant dense<0.000000e+00> : vector<1x64xf32>
    %2 = tpu.matmul %0, %1, %cst {dimension_numbers = #tpu.dot_dimension_numbers<[1], [1], [0], [0], [0, 0, 1, 0], [], []>} : vector<1x4096xf32>, vector<64x4096xf32>, vector<1x64xf32> -> vector<1x64xf32>
    %cst_3 = arith.constant 0.000000e+00 : f32
    %3 = vector.broadcast %cst_3 : f32 to vector<1x64xf32>
    %4 = arith.maximumf %2, %3 : vector<1x64xf32>
    %c0_4 = arith.constant 0 : index
    %c0_5 = arith.constant 0 : index
    %5 = vector.load %arg3[%c0_4, %c0_5] : memref<32x64xf32, #tpu.memory_space<vmem>>, vector<32x64xf32>
    %cst_6 = arith.constant dense<0.000000e+00> : vector<1x32xf32>
    %6 = tpu.matmul %4, %5, %cst_6 {dimension_numbers = #tpu.dot_dimension_numbers<[1], [1], [0], [0], [0, 0, 1, 0], [], []>} : vector<1x64xf32>, vector<32x64xf32>, vector<1x32xf32> -> vector<1x32xf32>
    %cst_7 = arith.constant 0.000000e+00 : f32
    %7 = vector.broadcast %cst_7 : f32 to vector<1x32xf32>
    %8 = arith.maximumf %6, %7 : vector<1x32xf32>
    %c0_8 = arith.constant 0 : index
    %c0_9 = arith.constant 0 : index
    %9 = vector.load %arg4[%c0_8, %c0_9] : memref<1x32xf32, #tpu.memory_space<vmem>>, vector<1x32xf32>
    %cst_10 = arith.constant dense<0.000000e+00> : vector<1x1xf32>
    %10 = tpu.matmul %8, %9, %cst_10 {dimension_numbers = #tpu.dot_dimension_numbers<[1], [1], [0], [0], [0, 0, 1, 0], [], []>} : vector<1x32xf32>, vector<1x32xf32>, vector<1x1xf32> -> vector<1x1xf32>
    %cst_11 = arith.constant 0.000000e+00 : f32
    %11 = vector.broadcast %cst_11 : f32 to vector<1x1xf32>
    %12 = arith.maximumf %10, %11 : vector<1x1xf32>
    %13 = math.absf %10 : vector<1x1xf32>
    %cst_12 = arith.constant 0.000000e+00 : f32
    %14 = vector.broadcast %cst_12 : f32 to vector<1x1xf32>
    %15 = arith.subf %14, %13 : vector<1x1xf32>
    %16 = math.exp %15 : vector<1x1xf32>
    %17 = math.log1p %16 : vector<1x1xf32>
    %18 = arith.addf %12, %17 : vector<1x1xf32>
    %c0_13 = arith.constant 0 : index
    %c0_14 = arith.constant 0 : index
    %19 = vector.load %arg5[%c0_13, %c0_14] : memref<1x1xf32, #tpu.memory_space<vmem>>, vector<1x1xf32>
    tpu.vector_store %arg5[%c0_13, %c0_14], %18 {strides = array<i32>} : memref<1x1xf32, #tpu.memory_space<vmem>>, vector<1x1xf32>,
    return
  }
  func.func @transform_0(%arg0: i32) -> (i32, i32) {
    %c0_i32 = arith.constant 0 : i32
    %c0_i32_0 = arith.constant 0 : i32
    %c0_i32_1 = arith.constant 0 : i32
    return %c0_i32, %c0_i32_0 : i32, i32
  }
  func.func @transform_1(%arg0: i32) -> (i32, i32) {
    %c0_i32 = arith.constant 0 : i32
    %c0_i32_0 = arith.constant 0 : i32
    %c0_i32_1 = arith.constant 0 : i32
    return %c0_i32, %c0_i32_0 : i32, i32
  }
  func.func @transform_2(%arg0: i32) -> (i32, i32) {
    %c0_i32 = arith.constant 0 : i32
    %c0_i32_0 = arith.constant 0 : i32
    %c0_i32_1 = arith.constant 0 : i32
    return %c0_i32, %c0_i32_0 : i32, i32
  }
  func.func @transform_3(%arg0: i32) -> (i32, i32) {
    %c0_i32 = arith.constant 0 : i32
    %c0_i32_0 = arith.constant 0 : i32
    %c0_i32_1 = arith.constant 0 : i32
    return %c0_i32, %c0_i32_0 : i32, i32
  }
  func.func @transform_4(%arg0: i32) -> (i32, i32) {
    %c0_i32 = arith.constant 0 : i32
    %c0_i32_0 = arith.constant 0 : i32
    %c0_i32_1 = arith.constant 0 : i32
    return %c0_i32, %c0_i32_0 : i32, i32
  }
}

</mosaic_0001>

<llo_original>
// kernel: tpu_custom_call.1
$region0: #{tpu_custom_call.1}
  #allocation0 [shape = 'u32[]', space=smem, size = 0x4, offset = 0x4, fixed_abs, tag = 'smem constant byte address 0x4 - core index']
  #allocation1 [shape = 'u32[72,128]{1,0:T(1,128)}', space=vmem, size = 0x9000, scoped, tag = 'internal scratch']
  %s0 = inlined_call_operand.hbm [shape: f32[1,4096], index: 0, kind: input, shape index: {}]
  %s1 = inlined_call_operand.hbm [shape: f32[64,4096], index: 1, kind: input, shape index: {}]
  %s2 = inlined_call_operand.hbm [shape: f32[32,64], index: 2, kind: input, shape index: {}]
  %s3 = inlined_call_operand.vmem [shape: f32[1,32], index: 3, kind: input, shape index: {}]
  %s4 = inlined_call_operand.hbm [shape: f32[1,1], index: 4, kind: output, shape index: {}]
  %s5 = sld [smem:[#allocation0]]
  $region38: #{tpu_custom_call.1} parent=0
    _
  %s7 = ssub.s32 1, %s5
  %s8 = scalar_select 0, %s7, %s5
  $region1: #{tpu_custom_call.1} parent=0
    #allocation2 [shape = 'u8[16384]{0}', space=vmem, size = 0x4000, scoped, tag = 'input window, operand 0, single buffered']
    #allocation3 [shape = 's32[1]{0}', space=sflag, size = 0x4, scoped, tag = 'scoped memory for tpu_custom_call.1']
    #allocation4 [shape = 's32[1]{0}', space=sflag, size = 0x4, scoped, tag = 'scoped memory for tpu_custom_call.1']
    #allocation5 [shape = 'u8[1048576]{0}', space=vmem, size = 0x100000, scoped, tag = 'input window, operand 1, single buffered']
    #allocation6 [shape = 's32[1]{0}', space=sflag, size = 0x4, scoped, tag = 'scoped memory for tpu_custom_call.1']
    #allocation7 [shape = 'u8[16384]{0}', space=vmem, size = 0x4000, scoped, tag = 'input window, operand 2, single buffered']
    #allocation8 [shape = 'u8[512]{0}', space=vmem, size = 0x400, scoped, tag = 'output window, operand 0, single buffered']
    %9 = vsyncpa [#allocation3], 0
    %10 = vsyncpa [#allocation6], 0
    %11 = vsyncpa [#allocation4], 0
    // Predicated region
    $region2: #{tpu_custom_call.1} parent=1 // pred_check
      _
    $region3: #{tpu_custom_call.1} parent=1 // pred_check_branch
      %13 = sbr.rel (0) target = $region5
    $region4: #{tpu_custom_call.1} parent=1 // pred_region
      %15 = vsyncadd [#allocation3], 0
      %s17 = sshll.u32 %s0, 4
      %s18 = int_to_ptr.hbm [resolvable:$true] %s17
      %s19 = sshll.u32 [#allocation2], 4
      %s20 = int_to_ptr.vmem [resolvable:$true] %s19
      %22 = dma.hbm_to_vmem [thread:$0]  %s18, 512, %s20, [#allocation3]
    $region5: #{tpu_custom_call.1} parent=1 // pred_fallthru
      _
    // Predicated region
    $region6: #{tpu_custom_call.1} parent=1 // pred_check
      _
    $region7: #{tpu_custom_call.1} parent=1 // pred_check_branch
      %24 = sbr.rel (0) target = $region9
    $region8: #{tpu_custom_call.1} parent=1 // pred_region
      %26 = vsyncadd [#allocation6], 0
      %s27 = sshll.u32 %s1, 4
      %s28 = int_to_ptr.hbm [resolvable:$true] %s27
      %s29 = sshll.u32 [#allocation5], 4
      %s30 = int_to_ptr.vmem [resolvable:$true] %s29
      %35 = dma.hbm_to_vmem [thread:$0]  %s28, 32768, %s30, [#allocation6], 4096, 4096, 256
    $region9: #{tpu_custom_call.1} parent=1 // pred_fallthru
      _
    // Predicated region
    $region10: #{tpu_custom_call.1} parent=1 // pred_check
      _
    $region11: #{tpu_custom_call.1} parent=1 // pred_check_branch
      %37 = sbr.rel (0) target = $region13
    $region12: #{tpu_custom_call.1} parent=1 // pred_region
      %39 = vsyncadd [#allocation6], 0
      %s40 = sshll.u32 %s2, 4
      %s41 = int_to_ptr.hbm [resolvable:$true] %s40
      %s42 = sshll.u32 [#allocation7], 4
      %s43 = int_to_ptr.vmem [resolvable:$true] %s42
      %48 = dma.hbm_to_vmem [thread:$0]  %s41, 512, %s43, [#allocation6], 128, 128, 8
    $region13: #{tpu_custom_call.1} parent=1 // pred_fallthru
      _
    // Predicated region
    $region14: #{tpu_custom_call.1} parent=1 // pred_check
      _
    $region15: #{tpu_custom_call.1} parent=1 // pred_check_branch
      %50 = sbr.rel (0) target = $region17
    $region16: #{tpu_custom_call.1} parent=1 // pred_region
      _
    $region17: #{tpu_custom_call.1} parent=1 // pred_fallthru
      _
    // Predicated region
    $region18: #{tpu_custom_call.1} parent=1 // pred_check
      _
    $region19: #{tpu_custom_call.1} parent=1 // pred_check_branch
      %52 = sbr.rel (0) target = $region21
    $region20: #{tpu_custom_call.1} parent=1 // pred_region
      %54 = dma.done [#allocation3], 512
    $region21: #{tpu_custom_call.1} parent=1 // pred_fallthru
      _
    // Predicated region
    $region22: #{tpu_custom_call.1} parent=1 // pred_check
      _
    $region23: #{tpu_custom_call.1} parent=1 // pred_check_branch
      %56 = sbr.rel (0) target = $region25
    $region24: #{tpu_custom_call.1} parent=1 // pred_region
      %58 = dma.done [#allocation6], 32768
    $region25: #{tpu_custom_call.1} parent=1 // pred_fallthru
      _
    // Predicated region
    $region26: #{tpu_custom_call.1} parent=1 // pred_check
      _
    $region27: #{tpu_custom_call.1} parent=1 // pred_check_branch
      %60 = sbr.rel (0) target = $region29
    $region28: #{tpu_custom_call.1} parent=1 // pred_region
      %62 = dma.done [#allocation6], 512
    $region29: #{tpu_custom_call.1} parent=1 // pred_fallthru
      _
    %v63 = vld [vmem:[#allocation2] sm:$0xff]
    %v64 = vld [vmem:[#allocation2 + $0x8] sm:$0xff]
    %v65 = vld [vmem:[#allocation2 + $0x10] sm:$0xff]
    %v66 = vld [vmem:[#allocation2 + $0x18] sm:$0xff]
    %v67 = vld [vmem:[#allocation5] sm:$0xff]
    %v68 = vld [vmem:[#allocation5 + $0x8] sm:$0xff]
    %v69 = vld [vmem:[#allocation5 + $0x10] sm:$0xff]
    %v70 = vld [vmem:[#allocation5 + $0x18] sm:$0xff]
    %v71 = vld [vmem:[#allocation5 + $0x20] sm:$0xff]
    %v72 = vld [vmem:[#allocation5 + $0x28] sm:$0xff]
    %v73 = vld [vmem:[#allocation5 + $0x30] sm:$0xff]
    %v74 = vld [vmem:[#allocation5 + $0x38] sm:$0xff]
    %v75 = vld [vmem:[#allocation5 + $0x40] sm:$0xff]
    %v76 = vld [vmem:[#allocation5 + $0x48] sm:$0xff]
    %v77 = vld [vmem:[#allocation5 + $0x50] sm:$0xff]
    %v78 = vld [vmem:[#allocation5 + $0x58] sm:$0xff]
    %v79 = vld [vmem:[#allocation5 + $0x60] sm:$0xff]
    %v80 = vld [vmem:[#allocation5 + $0x68] sm:$0xff]
    %v81 = vld [vmem:[#allocation5 + $0x70] sm:$0xff]
    %v82 = vld [vmem:[#allocation5 + $0x78] sm:$0xff]
    %v83 = vld [vmem:[#allocation5 + $0x80] sm:$0xff]
    %v84 = vld [vmem:[#allocation5 + $0x88] sm:$0xff]
    %v85 = vld [vmem:[#allocation5 + $0x90] sm:$0xff]
    %v86 = vld [vmem:[#allocation5 + $0x98] sm:$0xff]
    %v87 = vld [vmem:[#allocation5 + $0xa0] sm:$0xff]
    %v88 = vld [vmem:[#allocation5 + $0xa8] sm:$0xff]
    %v89 = vld [vmem:[#allocation5 + $0xb0] sm:$0xff]
    %v90 = vld [vmem:[#allocation5 + $0xb8] sm:$0xff]
    %v91 = vld [vmem:[#allocation5 + $0xc0] sm:$0xff]
    %v92 = vld [vmem:[#allocation5 + $0xc8] sm:$0xff]
    %v93 = vld [vmem:[#allocation5 + $0xd0] sm:$0xff]
    %v94 = vld [vmem:[#allocation5 + $0xd8] sm:$0xff]
    %v95 = vld [vmem:[#allocation5 + $0xe0] sm:$0xff]
    %v96 = vld [vmem:[#allocation5 + $0xe8] sm:$0xff]
    %v97 = vld [vmem:[#allocation5 + $0xf0] sm:$0xff]
    %v98 = vld [vmem:[#allocation5 + $0xf8] sm:$0xff]
    %v99 = vld [vmem:[#allocation5 + $0x100] sm:$0xff]
    %v100 = vld [vmem:[#allocation5 + $0x108] sm:$0xff]
    %v101 = vld [vmem:[#allocation5 + $0x110] sm:$0xff]
    %v102 = vld [vmem:[#allocation5 + $0x118] sm:$0xff]
    %v103 = vld [vmem:[#allocation5 + $0x120] sm:$0xff]
    %v104 = vld [vmem:[#allocation5 + $0x128] sm:$0xff]
    %v105 = vld [vmem:[#allocation5 + $0x130] sm:$0xff]
    %v106 = vld [vmem:[#allocation5 + $0x138] sm:$0xff]
    %v107 = vld [vmem:[#allocation5 + $0x140] sm:$0xff]
    %v108 = vld [vmem:[#allocation5 + $0x148] sm:$0xff]
    %v109 = vld [vmem:[#allocation5 + $0x150] sm:$0xff]
    %v110 = vld [vmem:[#allocation5 + $0x158] sm:$0xff]
    %v111 = vld [vmem:[#allocation5 + $0x160] sm:$0xff]
    %v112 = vld [vmem:[#allocation5 + $0x168] sm:$0xff]
    %v113 = vld [vmem:[#allocation5 + $0x170] sm:$0xff]
    %v114 = vld [vmem:[#allocation5 + $0x178] sm:$0xff]
    %v115 = vld [vmem:[#allocation5 + $0x180] sm:$0xff]
    %v116 = vld [vmem:[#allocation5 + $0x188] sm:$0xff]
    %v117 = vld [vmem:[#allocation5 + $0x190] sm:$0xff]
    %v118 = vld [vmem:[#allocation5 + $0x198] sm:$0xff]
    %v119 = vld [vmem:[#allocation5 + $0x1a0] sm:$0xff]
    %v120 = vld [vmem:[#allocation5 + $0x1a8] sm:$0xff]
    %v121 = vld [vmem:[#allocation5 + $0x1b0] sm:$0xff]
    %v122 = vld [vmem:[#allocation5 + $0x1b8] sm:$0xff]
    %v123 = vld [vmem:[#allocation5 + $0x1c0] sm:$0xff]
    %v124 = vld [vmem:[#allocation5 + $0x1c8] sm:$0xff]
    %v125 = vld [vmem:[#allocation5 + $0x1d0] sm:$0xff]
    %v126 = vld [vmem:[#allocation5 + $0x1d8] sm:$0xff]
    %v127 = vld [vmem:[#allocation5 + $0x1e0] sm:$0xff]
    %v128 = vld [vmem:[#allocation5 + $0x1e8] sm:$0xff]
    %v129 = vld [vmem:[#allocation5 + $0x1f0] sm:$0xff]
    %v130 = vld [vmem:[#allocation5 + $0x1f8] sm:$0xff]
    %v131 = vld [vmem:[#allocation5 + $0x200] sm:$0xff]
    %v132 = vld [vmem:[#allocation5 + $0x208] sm:$0xff]
    %v133 = vld [vmem:[#allocation5 + $0x210] sm:$0xff]
    %v134 = vld [vmem:[#allocation5 + $0x218] sm:$0xff]
    %v135 = vld [vmem:[#allocation5 + $0x220] sm:$0xff]
    %v136 = vld [vmem:[#allocation5 + $0x228] sm:$0xff]
    %v137 = vld [vmem:[#allocation5 + $0x230] sm:$0xff]
    %v138 = vld [vmem:[#allocation5 + $0x238] sm:$0xff]
    %v139 = vld [vmem:[#allocation5 + $0x240] sm:$0xff]
    %v140 = vld [vmem:[#allocation5 + $0x248] sm:$0xff]
    %v141 = vld [vmem:[#allocation5 + $0x250] sm:$0xff]
    %v142 = vld [vmem:[#allocation5 + $0x258] sm:$0xff]
    %v143 = vld [vmem:[#allocation5 + $0x260] sm:$0xff]
    %v144 = vld [vmem:[#allocation5 + $0x268] sm:$0xff]
    %v145 = vld [vmem:[#allocation5 + $0x270] sm:$0xff]
    %v146 = vld [vmem:[#allocation5 + $0x278] sm:$0xff]
    %v147 = vld [vmem:[#allocation5 + $0x280] sm:$0xff]
    %v148 = vld [vmem:[#allocation5 + $0x288] sm:$0xff]
    %v149 = vld [vmem:[#allocation5 + $0x290] sm:$0xff]
    %v150 = vld [vmem:[#allocation5 + $0x298] sm:$0xff]
    %v151 = vld [vmem:[#allocation5 + $0x2a0] sm:$0xff]
    %v152 = vld [vmem:[#allocation5 + $0x2a8] sm:$0xff]
    %v153 = vld [vmem:[#allocation5 + $0x2b0] sm:$0xff]
    %v154 = vld [vmem:[#allocation5 + $0x2b8] sm:$0xff]
    %v155 = vld [vmem:[#allocation5 + $0x2c0] sm:$0xff]
    %v156 = vld [vmem:[#allocation5 + $0x2c8] sm:$0xff]
    %v157 = vld [vmem:[#allocation5 + $0x2d0] sm:$0xff]
    %v158 = vld [vmem:[#allocation5 + $0x2d8] sm:$0xff]
    %v159 = vld [vmem:[#allocation5 + $0x2e0] sm:$0xff]
    %v160 = vld [vmem:[#allocation5 + $0x2e8] sm:$0xff]
    %v161 = vld [vmem:[#allocation5 + $0x2f0] sm:$0xff]
    %v162 = vld [vmem:[#allocation5 + $0x2f8] sm:$0xff]
    %v163 = vld [vmem:[#allocation5 + $0x300] sm:$0xff]
    %v164 = vld [vmem:[#allocation5 + $0x308] sm:$0xff]
    %v165 = vld [vmem:[#allocation5 + $0x310] sm:$0xff]
    %v166 = vld [vmem:[#allocation5 + $0x318] sm:$0xff]
    %v167 = vld [vmem:[#allocation5 + $0x320] sm:$0xff]
    %v168 = vld [vmem:[#allocation5 + $0x328] sm:$0xff]
    %v169 = vld [vmem:[#allocation5 + $0x330] sm:$0xff]
    %v170 = vld [vmem:[#allocation5 + $0x338] sm:$0xff]
    %v171 = vld [vmem:[#allocation5 + $0x340] sm:$0xff]
    %v172 = vld [vmem:[#allocation5 + $0x348] sm:$0xff]
    %v173 = vld [vmem:[#allocation5 + $0x350] sm:$0xff]
    %v174 = vld [vmem:[#allocation5 + $0x358] sm:$0xff]
    %v175 = vld [vmem:[#allocation5 + $0x360] sm:$0xff]
    %v176 = vld [vmem:[#allocation5 + $0x368] sm:$0xff]
    %v177 = vld [vmem:[#allocation5 + $0x370] sm:$0xff]
    %v178 = vld [vmem:[#allocation5 + $0x378] sm:$0xff]
    %v179 = vld [vmem:[#allocation5 + $0x380] sm:$0xff]
    %v180 = vld [vmem:[#allocation5 + $0x388] sm:$0xff]
    %v181 = vld [vmem:[#allocation5 + $0x390] sm:$0xff]
    %v182 = vld [vmem:[#allocation5 + $0x398] sm:$0xff]
    %v183 = vld [vmem:[#allocation5 + $0x3a0] sm:$0xff]
    %v184 = vld [vmem:[#allocation5 + $0x3a8] sm:$0xff]
    %v185 = vld [vmem:[#allocation5 + $0x3b0] sm:$0xff]
    %v186 = vld [vmem:[#allocation5 + $0x3b8] sm:$0xff]
    %v187 = vld [vmem:[#allocation5 + $0x3c0] sm:$0xff]
    %v188 = vld [vmem:[#allocation5 + $0x3c8] sm:$0xff]
    %v189 = vld [vmem:[#allocation5 + $0x3d0] sm:$0xff]
    %v190 = vld [vmem:[#allocation5 + $0x3d8] sm:$0xff]
    %v191 = vld [vmem:[#allocation5 + $0x3e0] sm:$0xff]
    %v192 = vld [vmem:[#allocation5 + $0x3e8] sm:$0xff]
    %v193 = vld [vmem:[#allocation5 + $0x3f0] sm:$0xff]
    %v194 = vld [vmem:[#allocation5 + $0x3f8] sm:$0xff]
    %v195 = vld [vmem:[#allocation5 + $0x400] sm:$0xff]
    %v196 = vld [vmem:[#allocation5 + $0x408] sm:$0xff]
    %v197 = vld [vmem:[#allocation5 + $0x410] sm:$0xff]
    %v198 = vld [vmem:[#allocation5 + $0x418] sm:$0xff]
    %v199 = vld [vmem:[#allocation5 + $0x420] sm:$0xff]
    %v200 = vld [vmem:[#allocation5 + $0x428] sm:$0xff]
    %v201 = vld [vmem:[#allocation5 + $0x430] sm:$0xff]
    %v202 = vld [vmem:[#allocation5 + $0x438] sm:$0xff]
    %v203 = vld [vmem:[#allocation5 + $0x440] sm:$0xff]
    %v204 = vld [vmem:[#allocation5 + $0x448] sm:$0xff]
    %v205 = vld [vmem:[#allocation5 + $0x450] sm:$0xff]
    %v206 = vld [vmem:[#allocation5 + $0x458] sm:$0xff]
    %v207 = vld [vmem:[#allocation5 + $0x460] sm:$0xff]
    %v208 = vld [vmem:[#allocation5 + $0x468] sm:$0xff]
    %v209 = vld [vmem:[#allocation5 + $0x470] sm:$0xff]
    %v210 = vld [vmem:[#allocation5 + $0x478] sm:$0xff]
    %v211 = vld [vmem:[#allocation5 + $0x480] sm:$0xff]
    %v212 = vld [vmem:[#allocation5 + $0x488] sm:$0xff]
    %v213 = vld [vmem:[#allocation5 + $0x490] sm:$0xff]
    %v214 = vld [vmem:[#allocation5 + $0x498] sm:$0xff]
    %v215 = vld [vmem:[#allocation5 + $0x4a0] sm:$0xff]
    %v216 = vld [vmem:[#allocation5 + $0x4a8] sm:$0xff]
    %v217 = vld [vmem:[#allocation5 + $0x4b0] sm:$0xff]
    %v218 = vld [vmem:[#allocation5 + $0x4b8] sm:$0xff]
    %v219 = vld [vmem:[#allocation5 + $0x4c0] sm:$0xff]
    %v220 = vld [vmem:[#allocation5 + $0x4c8] sm:$0xff]
    %v221 = vld [vmem:[#allocation5 + $0x4d0] sm:$0xff]
    %v222 = vld [vmem:[#allocation5 + $0x4d8] sm:$0xff]
    %v223 = vld [vmem:[#allocation5 + $0x4e0] sm:$0xff]
    %v224 = vld [vmem:[#allocation5 + $0x4e8] sm:$0xff]
    %v225 = vld [vmem:[#allocation5 + $0x4f0] sm:$0xff]
    %v226 = vld [vmem:[#allocation5 + $0x4f8] sm:$0xff]
    %v227 = vld [vmem:[#allocation5 + $0x500] sm:$0xff]
    %v228 = vld [vmem:[#allocation5 + $0x508] sm:$0xff]
    %v229 = vld [vmem:[#allocation5 + $0x510] sm:$0xff]
    %v230 = vld [vmem:[#allocation5 + $0x518] sm:$0xff]
    %v231 = vld [vmem:[#allocation5 + $0x520] sm:$0xff]
    %v232 = vld [vmem:[#allocation5 + $0x528] sm:$0xff]
    %v233 = vld [vmem:[#allocation5 + $0x530] sm:$0xff]
    %v234 = vld [vmem:[#allocation5 + $0x538] sm:$0xff]
    %v235 = vld [vmem:[#allocation5 + $0x540] sm:$0xff]
    %v236 = vld [vmem:[#allocation5 + $0x548] sm:$0xff]
    %v237 = vld [vmem:[#allocation5 + $0x550] sm:$0xff]
    %v238 = vld [vmem:[#allocation5 + $0x558] sm:$0xff]
    %v239 = vld [vmem:[#allocation5 + $0x560] sm:$0xff]
    %v240 = vld [vmem:[#allocation5 + $0x568] sm:$0xff]
    %v241 = vld [vmem:[#allocation5 + $0x570] sm:$0xff]
    %v242 = vld [vmem:[#allocation5 + $0x578] sm:$0xff]
    %v243 = vld [vmem:[#allocation5 + $0x580] sm:$0xff]
    %v244 = vld [vmem:[#allocation5 + $0x588] sm:$0xff]
    %v245 = vld [vmem:[#allocation5 + $0x590] sm:$0xff]
    %v246 = vld [vmem:[#allocation5 + $0x598] sm:$0xff]
    %v247 = vld [vmem:[#allocation5 + $0x5a0] sm:$0xff]
    %v248 = vld [vmem:[#allocation5 + $0x5a8] sm:$0xff]
    %v249 = vld [vmem:[#allocation5 + $0x5b0] sm:$0xff]
    %v250 = vld [vmem:[#allocation5 + $0x5b8] sm:$0xff]
    %v251 = vld [vmem:[#allocation5 + $0x5c0] sm:$0xff]
    %v252 = vld [vmem:[#allocation5 + $0x5c8] sm:$0xff]
    %v253 = vld [vmem:[#allocation5 + $0x5d0] sm:$0xff]
    %v254 = vld [vmem:[#allocation5 + $0x5d8] sm:$0xff]
    %v255 = vld [vmem:[#allocation5 + $0x5e0] sm:$0xff]
    %v256 = vld [vmem:[#allocation5 + $0x5e8] sm:$0xff]
    %v257 = vld [vmem:[#allocation5 + $0x5f0] sm:$0xff]
    %v258 = vld [vmem:[#allocation5 + $0x5f8] sm:$0xff]
    %v259 = vld [vmem:[#allocation5 + $0x600] sm:$0xff]
    %v260 = vld [vmem:[#allocation5 + $0x608] sm:$0xff]
    %v261 = vld [vmem:[#allocation5 + $0x610] sm:$0xff]
    %v262 = vld [vmem:[#allocation5 + $0x618] sm:$0xff]
    %v263 = vld [vmem:[#allocation5 + $0x620] sm:$0xff]
    %v264 = vld [vmem:[#allocation5 + $0x628] sm:$0xff]
    %v265 = vld [vmem:[#allocation5 + $0x630] sm:$0xff]
    %v266 = vld [vmem:[#allocation5 + $0x638] sm:$0xff]
    %v267 = vld [vmem:[#allocation5 + $0x640] sm:$0xff]
    %v268 = vld [vmem:[#allocation5 + $0x648] sm:$0xff]
    %v269 = vld [vmem:[#allocation5 + $0x650] sm:$0xff]
    %v270 = vld [vmem:[#allocation5 + $0x658] sm:$0xff]
    %v271 = vld [vmem:[#allocation5 + $0x660] sm:$0xff]
    %v272 = vld [vmem:[#allocation5 + $0x668] sm:$0xff]
    %v273 = vld [vmem:[#allocation5 + $0x670] sm:$0xff]
    %v274 = vld [vmem:[#allocation5 + $0x678] sm:$0xff]
    %v275 = vld [vmem:[#allocation5 + $0x680] sm:$0xff]
    %v276 = vld [vmem:[#allocation5 + $0x688] sm:$0xff]
    %v277 = vld [vmem:[#allocation5 + $0x690] sm:$0xff]
    %v278 = vld [vmem:[#allocation5 + $0x698] sm:$0xff]
    %v279 = vld [vmem:[#allocation5 + $0x6a0] sm:$0xff]
    %v280 = vld [vmem:[#allocation5 + $0x6a8] sm:$0xff]
    %v281 = vld [vmem:[#allocation5 + $0x6b0] sm:$0xff]
    %v282 = vld [vmem:[#allocation5 + $0x6b8] sm:$0xff]
    %v283 = vld [vmem:[#allocation5 + $0x6c0] sm:$0xff]
    %v284 = vld [vmem:[#allocation5 + $0x6c8] sm:$0xff]
    %v285 = vld [vmem:[#allocation5 + $0x6d0] sm:$0xff]
    %v286 = vld [vmem:[#allocation5 + $0x6d8] sm:$0xff]
    %v287 = vld [vmem:[#allocation5 + $0x6e0] sm:$0xff]
    %v288 = vld [vmem:[#allocation5 + $0x6e8] sm:$0xff]
    %v289 = vld [vmem:[#allocation5 + $0x6f0] sm:$0xff]
    %v290 = vld [vmem:[#allocation5 + $0x6f8] sm:$0xff]
    %v291 = vld [vmem:[#allocation5 + $0x700] sm:$0xff]
    %v292 = vld [vmem:[#allocation5 + $0x708] sm:$0xff]
    %v293 = vld [vmem:[#allocation5 + $0x710] sm:$0xff]
    %v294 = vld [vmem:[#allocation5 + $0x718] sm:$0xff]
    %v295 = vld [vmem:[#allocation5 + $0x720] sm:$0xff]
    %v296 = vld [vmem:[#allocation5 + $0x728] sm:$0xff]
    %v297 = vld [vmem:[#allocation5 + $0x730] sm:$0xff]
    %v298 = vld [vmem:[#allocation5 + $0x738] sm:$0xff]
    %v299 = vld [vmem:[#allocation5 + $0x740] sm:$0xff]
    %v300 = vld [vmem:[#allocation5 + $0x748] sm:$0xff]
    %v301 = vld [vmem:[#allocation5 + $0x750] sm:$0xff]
    %v302 = vld [vmem:[#allocation5 + $0x758] sm:$0xff]
    %v303 = vld [vmem:[#allocation5 + $0x760] sm:$0xff]
    %v304 = vld [vmem:[#allocation5 + $0x768] sm:$0xff]
    %v305 = vld [vmem:[#allocation5 + $0x770] sm:$0xff]
    %v306 = vld [vmem:[#allocation5 + $0x778] sm:$0xff]
    %v307 = vld [vmem:[#allocation5 + $0x780] sm:$0xff]
    %v308 = vld [vmem:[#allocation5 + $0x788] sm:$0xff]
    %v309 = vld [vmem:[#allocation5 + $0x790] sm:$0xff]
    %v310 = vld [vmem:[#allocation5 + $0x798] sm:$0xff]
    %v311 = vld [vmem:[#allocation5 + $0x7a0] sm:$0xff]
    %v312 = vld [vmem:[#allocation5 + $0x7a8] sm:$0xff]
    %v313 = vld [vmem:[#allocation5 + $0x7b0] sm:$0xff]
    %v314 = vld [vmem:[#allocation5 + $0x7b8] sm:$0xff]
    %v315 = vld [vmem:[#allocation5 + $0x7c0] sm:$0xff]
    %v316 = vld [vmem:[#allocation5 + $0x7c8] sm:$0xff]
    %v317 = vld [vmem:[#allocation5 + $0x7d0] sm:$0xff]
    %v318 = vld [vmem:[#allocation5 + $0x7d8] sm:$0xff]
    %v319 = vld [vmem:[#allocation5 + $0x7e0] sm:$0xff]
    %v320 = vld [vmem:[#allocation5 + $0x7e8] sm:$0xff]
    %v321 = vld [vmem:[#allocation5 + $0x7f0] sm:$0xff]
    %v322 = vld [vmem:[#allocation5 + $0x7f8] sm:$0xff]
    %v327 = vperm.slane %v63, 0
    %v328 = vperm.slane %v63, 1
    %v329 = vperm.slane %v63, 2
    %v330 = vperm.slane %v63, 3
    %v331 = vperm.slane %v63, 4
    %v332 = vperm.slane %v63, 5
    %v333 = vperm.slane %v63, 6
    %v334 = vperm.slane %v63, 7
    %v335 = vperm.slane %v64, 0
    %v336 = vperm.slane %v64, 1
    %v337 = vperm.slane %v64, 2
    %v338 = vperm.slane %v64, 3
    %v339 = vperm.slane %v64, 4
    %v340 = vperm.slane %v64, 5
    %v341 = vperm.slane %v64, 6
    %v342 = vperm.slane %v64, 7
    %v343 = vperm.slane %v65, 0
    %v344 = vperm.slane %v65, 1
    %v345 = vperm.slane %v65, 2
    %v346 = vperm.slane %v65, 3
    %v347 = vperm.slane %v65, 4
    %v348 = vperm.slane %v65, 5
    %v349 = vperm.slane %v65, 6
    %v350 = vperm.slane %v65, 7
    %v351 = vperm.slane %v66, 0
    %v352 = vperm.slane %v66, 1
    %v353 = vperm.slane %v66, 2
    %v354 = vperm.slane %v66, 3
    %v355 = vperm.slane %v66, 4
    %v356 = vperm.slane %v66, 5
    %v357 = vperm.slane %v66, 6
    %v358 = vperm.slane %v66, 7
    %391 = vmatpush.xpose.msra.mxu0 0.0
    %392 = vmatpush.xpose.msra.mxu0 0.0
    %393 = vmatpush.xpose.msra.mxu0 0.0
    %394 = vmatpush.xpose.msra.mxu0 0.0
    %395 = vmatpush.xpose.msra.mxu0 0.0
    %396 = vmatpush.xpose.msra.mxu0 0.0
    %397 = vmatpush.xpose.msra.mxu0 0.0
    %398 = vmatpush.xpose.msra.mxu0 0.0
    %399 = vmatpush.xpose.msra.mxu0 %v291
    %400 = vmatpush.xpose.msra.mxu0 %v259
    %401 = vmatpush.xpose.msra.mxu0 %v227
    %402 = vmatpush.xpose.msra.mxu0 %v195
    %403 = vmatpush.xpose.msra.mxu0 %v163
    %404 = vmatpush.xpose.msra.mxu0 %v131
    %405 = vmatpush.xpose.msra.mxu0 %v99
    %406 = vmatpush.xpose.msra.mxu0 %v67
    %407 = vmatmul.f32.gmra.mxu0 %v327
    %v408 = vpop.f32.mrf.mxu0
    %v409 = vadd.f32 0.0, %v408
    %410 = vdwg.mxu0
    %411 = vmatpush.xpose.msra.mxu0 0.0
    %412 = vmatpush.xpose.msra.mxu0 0.0
    %413 = vmatpush.xpose.msra.mxu0 0.0
    %414 = vmatpush.xpose.msra.mxu0 0.0
    %415 = vmatpush.xpose.msra.mxu0 0.0
    %416 = vmatpush.xpose.msra.mxu0 0.0
    %417 = vmatpush.xpose.msra.mxu0 0.0
    %418 = vmatpush.xpose.msra.mxu0 0.0
    %419 = vmatpush.xpose.msra.mxu0 %v292
    %420 = vmatpush.xpose.msra.mxu0 %v260
    %421 = vmatpush.xpose.msra.mxu0 %v228
    %422 = vmatpush.xpose.msra.mxu0 %v196
    %423 = vmatpush.xpose.msra.mxu0 %v164
    %424 = vmatpush.xpose.msra.mxu0 %v132
    %425 = vmatpush.xpose.msra.mxu0 %v100
    %426 = vmatpush.xpose.msra.mxu0 %v68
    %427 = vmatmul.f32.gmra.mxu0 %v328
    %v428 = vpop.f32.mrf.mxu0
    %v429 = vadd.f32 %v409, %v428
    %430 = vdwg.mxu0
    %431 = vmatpush.xpose.msra.mxu0 0.0
    %432 = vmatpush.xpose.msra.mxu0 0.0
    %433 = vmatpush.xpose.msra.mxu0 0.0
    %434 = vmatpush.xpose.msra.mxu0 0.0
    %435 = vmatpush.xpose.msra.mxu0 0.0
    %436 = vmatpush.xpose.msra.mxu0 0.0
    %437 = vmatpush.xpose.msra.mxu0 0.0
    %438 = vmatpush.xpose.msra.mxu0 0.0
    %439 = vmatpush.xpose.msra.mxu0 %v293
    %440 = vmatpush.xpose.msra.mxu0 %v261
    %441 = vmatpush.xpose.msra.mxu0 %v229
    %442 = vmatpush.xpose.msra.mxu0 %v197
    %443 = vmatpush.xpose.msra.mxu0 %v165
    %444 = vmatpush.xpose.msra.mxu0 %v133
    %445 = vmatpush.xpose.msra.mxu0 %v101
    %446 = vmatpush.xpose.msra.mxu0 %v69
    %447 = vmatmul.f32.gmra.mxu0 %v329
    %v448 = vpop.f32.mrf.mxu0
    %v449 = vadd.f32 %v429, %v448
    %450 = vdwg.mxu0
    %451 = vmatpush.xpose.msra.mxu0 0.0
    %452 = vmatpush.xpose.msra.mxu0 0.0
    %453 = vmatpush.xpose.msra.mxu0 0.0
    %454 = vmatpush.xpose.msra.mxu0 0.0
    %455 = vmatpush.xpose.msra.mxu0 0.0
    %456 = vmatpush.xpose.msra.mxu0 0.0
    %457 = vmatpush.xpose.msra.mxu0 0.0
    %458 = vmatpush.xpose.msra.mxu0 0.0
    %459 = vmatpush.xpose.msra.mxu0 %v294
    %460 = vmatpush.xpose.msra.mxu0 %v262
    %461 = vmatpush.xpose.msra.mxu0 %v230
    %462 = vmatpush.xpose.msra.mxu0 %v198
    %463 = vmatpush.xpose.msra.mxu0 %v166
    %464 = vmatpush.xpose.msra.mxu0 %v134
    %465 = vmatpush.xpose.msra.mxu0 %v102
    %466 = vmatpush.xpose.msra.mxu0 %v70
    %467 = vmatmul.f32.gmra.mxu0 %v330
    %v468 = vpop.f32.mrf.mxu0
    %v469 = vadd.f32 %v449, %v468
    %470 = vdwg.mxu0
    %471 = vmatpush.xpose.msra.mxu0 0.0
    %472 = vmatpush.xpose.msra.mxu0 0.0
    %473 = vmatpush.xpose.msra.mxu0 0.0
    %474 = vmatpush.xpose.msra.mxu0 0.0
    %475 = vmatpush.xpose.msra.mxu0 0.0
    %476 = vmatpush.xpose.msra.mxu0 0.0
    %477 = vmatpush.xpose.msra.mxu0 0.0
    %478 = vmatpush.xpose.msra.mxu0 0.0
    %479 = vmatpush.xpose.msra.mxu0 %v295
    %480 = vmatpush.xpose.msra.mxu0 %v263
    %481 = vmatpush.xpose.msra.mxu0 %v231
    %482 = vmatpush.xpose.msra.mxu0 %v199
    %483 = vmatpush.xpose.msra.mxu0 %v167
    %484 = vmatpush.xpose.msra.mxu0 %v135
    %485 = vmatpush.xpose.msra.mxu0 %v103
    %486 = vmatpush.xpose.msra.mxu0 %v71
    %487 = vmatmul.f32.gmra.mxu0 %v331
    %v488 = vpop.f32.mrf.mxu0
    %v489 = vadd.f32 %v469, %v488
    %490 = vdwg.mxu0
    %491 = vmatpush.xpose.msra.mxu0 0.0
    %492 = vmatpush.xpose.msra.mxu0 0.0
    %493 = vmatpush.xpose.msra.mxu0 0.0
    %494 = vmatpush.xpose.msra.mxu0 0.0
    %495 = vmatpush.xpose.msra.mxu0 0.0
    %496 = vmatpush.xpose.msra.mxu0 0.0
    %497 = vmatpush.xpose.msra.mxu0 0.0
    %498 = vmatpush.xpose.msra.mxu0 0.0
    %499 = vmatpush.xpose.msra.mxu0 %v296
    %500 = vmatpush.xpose.msra.mxu0 %v264
    %501 = vmatpush.xpose.msra.mxu0 %v232
    %502 = vmatpush.xpose.msra.mxu0 %v200
    %503 = vmatpush.xpose.msra.mxu0 %v168
    %504 = vmatpush.xpose.msra.mxu0 %v136
    %505 = vmatpush.xpose.msra.mxu0 %v104
    %506 = vmatpush.xpose.msra.mxu0 %v72
    %507 = vmatmul.f32.gmra.mxu0 %v332
    %v508 = vpop.f32.mrf.mxu0
    %v509 = vadd.f32 %v489, %v508
    %510 = vdwg.mxu0
    %511 = vmatpush.xpose.msra.mxu0 0.0
    %512 = vmatpush.xpose.msra.mxu0 0.0
    %513 = vmatpush.xpose.msra.mxu0 0.0
    %514 = vmatpush.xpose.msra.mxu0 0.0
    %515 = vmatpush.xpose.msra.mxu0 0.0
    %516 = vmatpush.xpose.msra.mxu0 0.0
    %517 = vmatpush.xpose.msra.mxu0 0.0
    %518 = vmatpush.xpose.msra.mxu0 0.0
    %519 = vmatpush.xpose.msra.mxu0 %v297
    %520 = vmatpush.xpose.msra.mxu0 %v265
    %521 = vmatpush.xpose.msra.mxu0 %v233
    %522 = vmatpush.xpose.msra.mxu0 %v201
    %523 = vmatpush.xpose.msra.mxu0 %v169
    %524 = vmatpush.xpose.msra.mxu0 %v137
    %525 = vmatpush.xpose.msra.mxu0 %v105
    %526 = vmatpush.xpose.msra.mxu0 %v73
    %527 = vmatmul.f32.gmra.mxu0 %v333
    %v528 = vpop.f32.mrf.mxu0
    %v529 = vadd.f32 %v509, %v528
    %530 = vdwg.mxu0
    %531 = vmatpush.xpose.msra.mxu0 0.0
    %532 = vmatpush.xpose.msra.mxu0 0.0
    %533 = vmatpush.xpose.msra.mxu0 0.0
    %534 = vmatpush.xpose.msra.mxu0 0.0
    %535 = vmatpush.xpose.msra.mxu0 0.0
    %536 = vmatpush.xpose.msra.mxu0 0.0
    %537 = vmatpush.xpose.msra.mxu0 0.0
    %538 = vmatpush.xpose.msra.mxu0 0.0
    %539 = vmatpush.xpose.msra.mxu0 %v298
    %540 = vmatpush.xpose.msra.mxu0 %v266
    %541 = vmatpush.xpose.msra.mxu0 %v234
    %542 = vmatpush.xpose.msra.mxu0 %v202
    %543 = vmatpush.xpose.msra.mxu0 %v170
    %544 = vmatpush.xpose.msra.mxu0 %v138
    %545 = vmatpush.xpose.msra.mxu0 %v106
    %546 = vmatpush.xpose.msra.mxu0 %v74
    %547 = vmatmul.f32.gmra.mxu0 %v334
    %v548 = vpop.f32.mrf.mxu0
    %v549 = vadd.f32 %v529, %v548
    %550 = vdwg.mxu0
    %551 = vmatpush.xpose.msra.mxu0 0.0
    %552 = vmatpush.xpose.msra.mxu0 0.0
    %553 = vmatpush.xpose.msra.mxu0 0.0
    %554 = vmatpush.xpose.msra.mxu0 0.0
    %555 = vmatpush.xpose.msra.mxu0 0.0
    %556 = vmatpush.xpose.msra.mxu0 0.0
    %557 = vmatpush.xpose.msra.mxu0 0.0
    %558 = vmatpush.xpose.msra.mxu0 0.0
    %559 = vmatpush.xpose.msra.mxu0 %v299
    %560 = vmatpush.xpose.msra.mxu0 %v267
    %561 = vmatpush.xpose.msra.mxu0 %v235
    %562 = vmatpush.xpose.msra.mxu0 %v203
    %563 = vmatpush.xpose.msra.mxu0 %v171
    %564 = vmatpush.xpose.msra.mxu0 %v139
    %565 = vmatpush.xpose.msra.mxu0 %v107
    %566 = vmatpush.xpose.msra.mxu0 %v75
    %567 = vmatmul.f32.gmra.mxu0 %v335
    %v568 = vpop.f32.mrf.mxu0
    %v569 = vadd.f32 %v549, %v568
    %570 = vdwg.mxu0
    %571 = vmatpush.xpose.msra.mxu0 0.0
    %572 = vmatpush.xpose.msra.mxu0 0.0
    %573 = vmatpush.xpose.msra.mxu0 0.0
    %574 = vmatpush.xpose.msra.mxu0 0.0
    %575 = vmatpush.xpose.msra.mxu0 0.0
    %576 = vmatpush.xpose.msra.mxu0 0.0
    %577 = vmatpush.xpose.msra.mxu0 0.0
    %578 = vmatpush.xpose.msra.mxu0 0.0
    %579 = vmatpush.xpose.msra.mxu0 %v300
    %580 = vmatpush.xpose.msra.mxu0 %v268
    %581 = vmatpush.xpose.msra.mxu0 %v236
    %582 = vmatpush.xpose.msra.mxu0 %v204
    %583 = vmatpush.xpose.msra.mxu0 %v172
    %584 = vmatpush.xpose.msra.mxu0 %v140
    %585 = vmatpush.xpose.msra.mxu0 %v108
    %586 = vmatpush.xpose.msra.mxu0 %v76
    %587 = vmatmul.f32.gmra.mxu0 %v336
    %v588 = vpop.f32.mrf.mxu0
    %v589 = vadd.f32 %v569, %v588
    %590 = vdwg.mxu0
    %591 = vmatpush.xpose.msra.mxu0 0.0
    %592 = vmatpush.xpose.msra.mxu0 0.0
    %593 = vmatpush.xpose.msra.mxu0 0.0
    %594 = vmatpush.xpose.msra.mxu0 0.0
    %595 = vmatpush.xpose.msra.mxu0 0.0
    %596 = vmatpush.xpose.msra.mxu0 0.0
    %597 = vmatpush.xpose.msra.mxu0 0.0
    %598 = vmatpush.xpose.msra.mxu0 0.0
    %599 = vmatpush.xpose.msra.mxu0 %v301
    %600 = vmatpush.xpose.msra.mxu0 %v269
    %601 = vmatpush.xpose.msra.mxu0 %v237
    %602 = vmatpush.xpose.msra.mxu0 %v205
    %603 = vmatpush.xpose.msra.mxu0 %v173
    %604 = vmatpush.xpose.msra.mxu0 %v141
    %605 = vmatpush.xpose.msra.mxu0 %v109
    %606 = vmatpush.xpose.msra.mxu0 %v77
    %607 = vmatmul.f32.gmra.mxu0 %v337
    %v608 = vpop.f32.mrf.mxu0
    %v609 = vadd.f32 %v589, %v608
    %610 = vdwg.mxu0
    %611 = vmatpush.xpose.msra.mxu0 0.0
    %612 = vmatpush.xpose.msra.mxu0 0.0
    %613 = vmatpush.xpose.msra.mxu0 0.0
    %614 = vmatpush.xpose.msra.mxu0 0.0
    %615 = vmatpush.xpose.msra.mxu0 0.0
    %616 = vmatpush.xpose.msra.mxu0 0.0
    %617 = vmatpush.xpose.msra.mxu0 0.0
    %618 = vmatpush.xpose.msra.mxu0 0.0
    %619 = vmatpush.xpose.msra.mxu0 %v302
    %620 = vmatpush.xpose.msra.mxu0 %v270
    %621 = vmatpush.xpose.msra.mxu0 %v238
    %622 = vmatpush.xpose.msra.mxu0 %v206
    %623 = vmatpush.xpose.msra.mxu0 %v174
    %624 = vmatpush.xpose.msra.mxu0 %v142
    %625 = vmatpush.xpose.msra.mxu0 %v110
    %626 = vmatpush.xpose.msra.mxu0 %v78
    %627 = vmatmul.f32.gmra.mxu0 %v338
    %v628 = vpop.f32.mrf.mxu0
    %v629 = vadd.f32 %v609, %v628
    %630 = vdwg.mxu0
    %631 = vmatpush.xpose.msra.mxu0 0.0
    %632 = vmatpush.xpose.msra.mxu0 0.0
    %633 = vmatpush.xpose.msra.mxu0 0.0
    %634 = vmatpush.xpose.msra.mxu0 0.0
    %635 = vmatpush.xpose.msra.mxu0 0.0
    %636 = vmatpush.xpose.msra.mxu0 0.0
    %637 = vmatpush.xpose.msra.mxu0 0.0
    %638 = vmatpush.xpose.msra.mxu0 0.0
    %639 = vmatpush.xpose.msra.mxu0 %v303
    %640 = vmatpush.xpose.msra.mxu0 %v271
    %641 = vmatpush.xpose.msra.mxu0 %v239
    %642 = vmatpush.xpose.msra.mxu0 %v207
    %643 = vmatpush.xpose.msra.mxu0 %v175
    %644 = vmatpush.xpose.msra.mxu0 %v143
    %645 = vmatpush.xpose.msra.mxu0 %v111
    %646 = vmatpush.xpose.msra.mxu0 %v79
    %647 = vmatmul.f32.gmra.mxu0 %v339
    %v648 = vpop.f32.mrf.mxu0
    %v649 = vadd.f32 %v629, %v648
    %650 = vdwg.mxu0
    %651 = vmatpush.xpose.msra.mxu0 0.0
    %652 = vmatpush.xpose.msra.mxu0 0.0
    %653 = vmatpush.xpose.msra.mxu0 0.0
    %654 = vmatpush.xpose.msra.mxu0 0.0
    %655 = vmatpush.xpose.msra.mxu0 0.0
    %656 = vmatpush.xpose.msra.mxu0 0.0
    %657 = vmatpush.xpose.msra.mxu0 0.0
    %658 = vmatpush.xpose.msra.mxu0 0.0
    %659 = vmatpush.xpose.msra.mxu0 %v304
    %660 = vmatpush.xpose.msra.mxu0 %v272
    %661 = vmatpush.xpose.msra.mxu0 %v240
    %662 = vmatpush.xpose.msra.mxu0 %v208
    %663 = vmatpush.xpose.msra.mxu0 %v176
    %664 = vmatpush.xpose.msra.mxu0 %v144
    %665 = vmatpush.xpose.msra.mxu0 %v112
    %666 = vmatpush.xpose.msra.mxu0 %v80
    %667 = vmatmul.f32.gmra.mxu0 %v340
    %v668 = vpop.f32.mrf.mxu0
    %v669 = vadd.f32 %v649, %v668
    %670 = vdwg.mxu0
    %671 = vmatpush.xpose.msra.mxu0 0.0
    %672 = vmatpush.xpose.msra.mxu0 0.0
    %673 = vmatpush.xpose.msra.mxu0 0.0
    %674 = vmatpush.xpose.msra.mxu0 0.0
    %675 = vmatpush.xpose.msra.mxu0 0.0
    %676 = vmatpush.xpose.msra.mxu0 0.0
    %677 = vmatpush.xpose.msra.mxu0 0.0
    %678 = vmatpush.xpose.msra.mxu0 0.0
    %679 = vmatpush.xpose.msra.mxu0 %v305
    %680 = vmatpush.xpose.msra.mxu0 %v273
    %681 = vmatpush.xpose.msra.mxu0 %v241
    %682 = vmatpush.xpose.msra.mxu0 %v209
    %683 = vmatpush.xpose.msra.mxu0 %v177
    %684 = vmatpush.xpose.msra.mxu0 %v145
    %685 = vmatpush.xpose.msra.mxu0 %v113
    %686 = vmatpush.xpose.msra.mxu0 %v81
    %687 = vmatmul.f32.gmra.mxu0 %v341
    %v688 = vpop.f32.mrf.mxu0
    %v689 = vadd.f32 %v669, %v688
    %690 = vdwg.mxu0
    %691 = vmatpush.xpose.msra.mxu0 0.0
    %692 = vmatpush.xpose.msra.mxu0 0.0
    %693 = vmatpush.xpose.msra.mxu0 0.0
    %694 = vmatpush.xpose.msra.mxu0 0.0
    %695 = vmatpush.xpose.msra.mxu0 0.0
    %696 = vmatpush.xpose.msra.mxu0 0.0
    %697 = vmatpush.xpose.msra.mxu0 0.0
    %698 = vmatpush.xpose.msra.mxu0 0.0
    %699 = vmatpush.xpose.msra.mxu0 %v306
    %700 = vmatpush.xpose.msra.mxu0 %v274
    %701 = vmatpush.xpose.msra.mxu0 %v242
    %702 = vmatpush.xpose.msra.mxu0 %v210
    %703 = vmatpush.xpose.msra.mxu0 %v178
    %704 = vmatpush.xpose.msra.mxu0 %v146
    %705 = vmatpush.xpose.msra.mxu0 %v114
    %706 = vmatpush.xpose.msra.mxu0 %v82
    %707 = vmatmul.f32.gmra.mxu0 %v342
    %v708 = vpop.f32.mrf.mxu0
    %v709 = vadd.f32 %v689, %v708
    %710 = vdwg.mxu0
    %711 = vmatpush.xpose.msra.mxu0 0.0
    %712 = vmatpush.xpose.msra.mxu0 0.0
    %713 = vmatpush.xpose.msra.mxu0 0.0
    %714 = vmatpush.xpose.msra.mxu0 0.0
    %715 = vmatpush.xpose.msra.mxu0 0.0
    %716 = vmatpush.xpose.msra.mxu0 0.0
    %717 = vmatpush.xpose.msra.mxu0 0.0
    %718 = vmatpush.xpose.msra.mxu0 0.0
    %719 = vmatpush.xpose.msra.mxu0 %v307
    %720 = vmatpush.xpose.msra.mxu0 %v275
    %721 = vmatpush.xpose.msra.mxu0 %v243
    %722 = vmatpush.xpose.msra.mxu0 %v211
    %723 = vmatpush.xpose.msra.mxu0 %v179
    %724 = vmatpush.xpose.msra.mxu0 %v147
    %725 = vmatpush.xpose.msra.mxu0 %v115
    %726 = vmatpush.xpose.msra.mxu0 %v83
    %727 = vmatmul.f32.gmra.mxu0 %v343
    %v728 = vpop.f32.mrf.mxu0
    %v729 = vadd.f32 %v709, %v728
    %730 = vdwg.mxu0
    %731 = vmatpush.xpose.msra.mxu0 0.0
    %732 = vmatpush.xpose.msra.mxu0 0.0
    %733 = vmatpush.xpose.msra.mxu0 0.0
    %734 = vmatpush.xpose.msra.mxu0 0.0
    %735 = vmatpush.xpose.msra.mxu0 0.0
    %736 = vmatpush.xpose.msra.mxu0 0.0
    %737 = vmatpush.xpose.msra.mxu0 0.0
    %738 = vmatpush.xpose.msra.mxu0 0.0
    %739 = vmatpush.xpose.msra.mxu0 %v308
    %740 = vmatpush.xpose.msra.mxu0 %v276
    %741 = vmatpush.xpose.msra.mxu0 %v244
    %742 = vmatpush.xpose.msra.mxu0 %v212
    %743 = vmatpush.xpose.msra.mxu0 %v180
    %744 = vmatpush.xpose.msra.mxu0 %v148
    %745 = vmatpush.xpose.msra.mxu0 %v116
    %746 = vmatpush.xpose.msra.mxu0 %v84
    %747 = vmatmul.f32.gmra.mxu0 %v344
    %v748 = vpop.f32.mrf.mxu0
    %v749 = vadd.f32 %v729, %v748
    %750 = vdwg.mxu0
    %751 = vmatpush.xpose.msra.mxu0 0.0
    %752 = vmatpush.xpose.msra.mxu0 0.0
    %753 = vmatpush.xpose.msra.mxu0 0.0
    %754 = vmatpush.xpose.msra.mxu0 0.0
    %755 = vmatpush.xpose.msra.mxu0 0.0
    %756 = vmatpush.xpose.msra.mxu0 0.0
    %757 = vmatpush.xpose.msra.mxu0 0.0
    %758 = vmatpush.xpose.msra.mxu0 0.0
    %759 = vmatpush.xpose.msra.mxu0 %v309
    %760 = vmatpush.xpose.msra.mxu0 %v277
    %761 = vmatpush.xpose.msra.mxu0 %v245
    %762 = vmatpush.xpose.msra.mxu0 %v213
    %763 = vmatpush.xpose.msra.mxu0 %v181
    %764 = vmatpush.xpose.msra.mxu0 %v149
    %765 = vmatpush.xpose.msra.mxu0 %v117
    %766 = vmatpush.xpose.msra.mxu0 %v85
    %767 = vmatmul.f32.gmra.mxu0 %v345
    %v768 = vpop.f32.mrf.mxu0
    %v769 = vadd.f32 %v749, %v768
    %770 = vdwg.mxu0
    %771 = vmatpush.xpose.msra.mxu0 0.0
    %772 = vmatpush.xpose.msra.mxu0 0.0
    %773 = vmatpush.xpose.msra.mxu0 0.0
    %774 = vmatpush.xpose.msra.mxu0 0.0
    %775 = vmatpush.xpose.msra.mxu0 0.0
    %776 = vmatpush.xpose.msra.mxu0 0.0
    %777 = vmatpush.xpose.msra.mxu0 0.0
    %778 = vmatpush.xpose.msra.mxu0 0.0
    %779 = vmatpush.xpose.msra.mxu0 %v310
    %780 = vmatpush.xpose.msra.mxu0 %v278
    %781 = vmatpush.xpose.msra.mxu0 %v246
    %782 = vmatpush.xpose.msra.mxu0 %v214
    %783 = vmatpush.xpose.msra.mxu0 %v182
    %784 = vmatpush.xpose.msra.mxu0 %v150
    %785 = vmatpush.xpose.msra.mxu0 %v118
    %786 = vmatpush.xpose.msra.mxu0 %v86
    %787 = vmatmul.f32.gmra.mxu0 %v346
    %v788 = vpop.f32.mrf.mxu0
    %v789 = vadd.f32 %v769, %v788
    %790 = vdwg.mxu0
    %791 = vmatpush.xpose.msra.mxu0 0.0
    %792 = vmatpush.xpose.msra.mxu0 0.0
    %793 = vmatpush.xpose.msra.mxu0 0.0
    %794 = vmatpush.xpose.msra.mxu0 0.0
    %795 = vmatpush.xpose.msra.mxu0 0.0
    %796 = vmatpush.xpose.msra.mxu0 0.0
    %797 = vmatpush.xpose.msra.mxu0 0.0
    %798 = vmatpush.xpose.msra.mxu0 0.0
    %799 = vmatpush.xpose.msra.mxu0 %v311
    %800 = vmatpush.xpose.msra.mxu0 %v279
    %801 = vmatpush.xpose.msra.mxu0 %v247
    %802 = vmatpush.xpose.msra.mxu0 %v215
    %803 = vmatpush.xpose.msra.mxu0 %v183
    %804 = vmatpush.xpose.msra.mxu0 %v151
    %805 = vmatpush.xpose.msra.mxu0 %v119
    %806 = vmatpush.xpose.msra.mxu0 %v87
    %807 = vmatmul.f32.gmra.mxu0 %v347
    %v808 = vpop.f32.mrf.mxu0
    %v809 = vadd.f32 %v789, %v808
    %810 = vdwg.mxu0
    %811 = vmatpush.xpose.msra.mxu0 0.0
    %812 = vmatpush.xpose.msra.mxu0 0.0
    %813 = vmatpush.xpose.msra.mxu0 0.0
    %814 = vmatpush.xpose.msra.mxu0 0.0
    %815 = vmatpush.xpose.msra.mxu0 0.0
    %816 = vmatpush.xpose.msra.mxu0 0.0
    %817 = vmatpush.xpose.msra.mxu0 0.0
    %818 = vmatpush.xpose.msra.mxu0 0.0
    %819 = vmatpush.xpose.msra.mxu0 %v312
    %820 = vmatpush.xpose.msra.mxu0 %v280
    %821 = vmatpush.xpose.msra.mxu0 %v248
    %822 = vmatpush.xpose.msra.mxu0 %v216
    %823 = vmatpush.xpose.msra.mxu0 %v184
    %824 = vmatpush.xpose.msra.mxu0 %v152
    %825 = vmatpush.xpose.msra.mxu0 %v120
    %826 = vmatpush.xpose.msra.mxu0 %v88
    %827 = vmatmul.f32.gmra.mxu0 %v348
    %v828 = vpop.f32.mrf.mxu0
    %v829 = vadd.f32 %v809, %v828
    %830 = vdwg.mxu0
    %831 = vmatpush.xpose.msra.mxu0 0.0
    %832 = vmatpush.xpose.msra.mxu0 0.0
    %833 = vmatpush.xpose.msra.mxu0 0.0
    %834 = vmatpush.xpose.msra.mxu0 0.0
    %835 = vmatpush.xpose.msra.mxu0 0.0
    %836 = vmatpush.xpose.msra.mxu0 0.0
    %837 = vmatpush.xpose.msra.mxu0 0.0
    %838 = vmatpush.xpose.msra.mxu0 0.0
    %839 = vmatpush.xpose.msra.mxu0 %v313
    %840 = vmatpush.xpose.msra.mxu0 %v281
    %841 = vmatpush.xpose.msra.mxu0 %v249
    %842 = vmatpush.xpose.msra.mxu0 %v217
    %843 = vmatpush.xpose.msra.mxu0 %v185
    %844 = vmatpush.xpose.msra.mxu0 %v153
    %845 = vmatpush.xpose.msra.mxu0 %v121
    %846 = vmatpush.xpose.msra.mxu0 %v89
    %847 = vmatmul.f32.gmra.mxu0 %v349
    %v848 = vpop.f32.mrf.mxu0
    %v849 = vadd.f32 %v829, %v848
    %850 = vdwg.mxu0
    %851 = vmatpush.xpose.msra.mxu0 0.0
    %852 = vmatpush.xpose.msra.mxu0 0.0
    %853 = vmatpush.xpose.msra.mxu0 0.0
    %854 = vmatpush.xpose.msra.mxu0 0.0
    %855 = vmatpush.xpose.msra.mxu0 0.0
    %856 = vmatpush.xpose.msra.mxu0 0.0
    %857 = vmatpush.xpose.msra.mxu0 0.0
    %858 = vmatpush.xpose.msra.mxu0 0.0
    %859 = vmatpush.xpose.msra.mxu0 %v314
    %860 = vmatpush.xpose.msra.mxu0 %v282
    %861 = vmatpush.xpose.msra.mxu0 %v250
    %862 = vmatpush.xpose.msra.mxu0 %v218
    %863 = vmatpush.xpose.msra.mxu0 %v186
    %864 = vmatpush.xpose.msra.mxu0 %v154
    %865 = vmatpush.xpose.msra.mxu0 %v122
    %866 = vmatpush.xpose.msra.mxu0 %v90
    %867 = vmatmul.f32.gmra.mxu0 %v350
    %v868 = vpop.f32.mrf.mxu0
    %v869 = vadd.f32 %v849, %v868
    %870 = vdwg.mxu0
    %871 = vmatpush.xpose.msra.mxu0 0.0
    %872 = vmatpush.xpose.msra.mxu0 0.0
    %873 = vmatpush.xpose.msra.mxu0 0.0
    %874 = vmatpush.xpose.msra.mxu0 0.0
    %875 = vmatpush.xpose.msra.mxu0 0.0
    %876 = vmatpush.xpose.msra.mxu0 0.0
    %877 = vmatpush.xpose.msra.mxu0 0.0
    %878 = vmatpush.xpose.msra.mxu0 0.0
    %879 = vmatpush.xpose.msra.mxu0 %v315
    %880 = vmatpush.xpose.msra.mxu0 %v283
    %881 = vmatpush.xpose.msra.mxu0 %v251
    %882 = vmatpush.xpose.msra.mxu0 %v219
    %883 = vmatpush.xpose.msra.mxu0 %v187
    %884 = vmatpush.xpose.msra.mxu0 %v155
    %885 = vmatpush.xpose.msra.mxu0 %v123
    %886 = vmatpush.xpose.msra.mxu0 %v91
    %887 = vmatmul.f32.gmra.mxu0 %v351
    %v888 = vpop.f32.mrf.mxu0
    %v889 = vadd.f32 %v869, %v888
    %890 = vdwg.mxu0
    %891 = vmatpush.xpose.msra.mxu0 0.0
    %892 = vmatpush.xpose.msra.mxu0 0.0
    %893 = vmatpush.xpose.msra.mxu0 0.0
    %894 = vmatpush.xpose.msra.mxu0 0.0
    %895 = vmatpush.xpose.msra.mxu0 0.0
    %896 = vmatpush.xpose.msra.mxu0 0.0
    %897 = vmatpush.xpose.msra.mxu0 0.0
    %898 = vmatpush.xpose.msra.mxu0 0.0
    %899 = vmatpush.xpose.msra.mxu0 %v316
    %900 = vmatpush.xpose.msra.mxu0 %v284
    %901 = vmatpush.xpose.msra.mxu0 %v252
    %902 = vmatpush.xpose.msra.mxu0 %v220
    %903 = vmatpush.xpose.msra.mxu0 %v188
    %904 = vmatpush.xpose.msra.mxu0 %v156
    %905 = vmatpush.xpose.msra.mxu0 %v124
    %906 = vmatpush.xpose.msra.mxu0 %v92
    %907 = vmatmul.f32.gmra.mxu0 %v352
    %v908 = vpop.f32.mrf.mxu0
    %v909 = vadd.f32 %v889, %v908
    %910 = vdwg.mxu0
    %911 = vmatpush.xpose.msra.mxu0 0.0
    %912 = vmatpush.xpose.msra.mxu0 0.0
    %913 = vmatpush.xpose.msra.mxu0 0.0
    %914 = vmatpush.xpose.msra.mxu0 0.0
    %915 = vmatpush.xpose.msra.mxu0 0.0
    %916 = vmatpush.xpose.msra.mxu0 0.0
    %917 = vmatpush.xpose.msra.mxu0 0.0
    %918 = vmatpush.xpose.msra.mxu0 0.0
    %919 = vmatpush.xpose.msra.mxu0 %v317
    %920 = vmatpush.xpose.msra.mxu0 %v285
    %921 = vmatpush.xpose.msra.mxu0 %v253
    %922 = vmatpush.xpose.msra.mxu0 %v221
    %923 = vmatpush.xpose.msra.mxu0 %v189
    %924 = vmatpush.xpose.msra.mxu0 %v157
    %925 = vmatpush.xpose.msra.mxu0 %v125
    %926 = vmatpush.xpose.msra.mxu0 %v93
    %927 = vmatmul.f32.gmra.mxu0 %v353
    %v928 = vpop.f32.mrf.mxu0
    %v929 = vadd.f32 %v909, %v928
    %930 = vdwg.mxu0
    %931 = vmatpush.xpose.msra.mxu0 0.0
    %932 = vmatpush.xpose.msra.mxu0 0.0
    %933 = vmatpush.xpose.msra.mxu0 0.0
    %934 = vmatpush.xpose.msra.mxu0 0.0
    %935 = vmatpush.xpose.msra.mxu0 0.0
    %936 = vmatpush.xpose.msra.mxu0 0.0
    %937 = vmatpush.xpose.msra.mxu0 0.0
    %938 = vmatpush.xpose.msra.mxu0 0.0
    %939 = vmatpush.xpose.msra.mxu0 %v318
    %940 = vmatpush.xpose.msra.mxu0 %v286
    %941 = vmatpush.xpose.msra.mxu0 %v254
    %942 = vmatpush.xpose.msra.mxu0 %v222
    %943 = vmatpush.xpose.msra.mxu0 %v190
    %944 = vmatpush.xpose.msra.mxu0 %v158
    %945 = vmatpush.xpose.msra.mxu0 %v126
    %946 = vmatpush.xpose.msra.mxu0 %v94
    %947 = vmatmul.f32.gmra.mxu0 %v354
    %v948 = vpop.f32.mrf.mxu0
    %v949 = vadd.f32 %v929, %v948
    %950 = vdwg.mxu0
    %951 = vmatpush.xpose.msra.mxu0 0.0
    %952 = vmatpush.xpose.msra.mxu0 0.0
    %953 = vmatpush.xpose.msra.mxu0 0.0
    %954 = vmatpush.xpose.msra.mxu0 0.0
    %955 = vmatpush.xpose.msra.mxu0 0.0
    %956 = vmatpush.xpose.msra.mxu0 0.0
    %957 = vmatpush.xpose.msra.mxu0 0.0
    %958 = vmatpush.xpose.msra.mxu0 0.0
    %959 = vmatpush.xpose.msra.mxu0 %v319
    %960 = vmatpush.xpose.msra.mxu0 %v287
    %961 = vmatpush.xpose.msra.mxu0 %v255
    %962 = vmatpush.xpose.msra.mxu0 %v223
    %963 = vmatpush.xpose.msra.mxu0 %v191
    %964 = vmatpush.xpose.msra.mxu0 %v159
    %965 = vmatpush.xpose.msra.mxu0 %v127
    %966 = vmatpush.xpose.msra.mxu0 %v95
    %967 = vmatmul.f32.gmra.mxu0 %v355
    %v968 = vpop.f32.mrf.mxu0
    %v969 = vadd.f32 %v949, %v968
    %970 = vdwg.mxu0
    %971 = vmatpush.xpose.msra.mxu0 0.0
    %972 = vmatpush.xpose.msra.mxu0 0.0
    %973 = vmatpush.xpose.msra.mxu0 0.0
    %974 = vmatpush.xpose.msra.mxu0 0.0
    %975 = vmatpush.xpose.msra.mxu0 0.0
    %976 = vmatpush.xpose.msra.mxu0 0.0
    %977 = vmatpush.xpose.msra.mxu0 0.0
    %978 = vmatpush.xpose.msra.mxu0 0.0
    %979 = vmatpush.xpose.msra.mxu0 %v320
    %980 = vmatpush.xpose.msra.mxu0 %v288
    %981 = vmatpush.xpose.msra.mxu0 %v256
    %982 = vmatpush.xpose.msra.mxu0 %v224
    %983 = vmatpush.xpose.msra.mxu0 %v192
    %984 = vmatpush.xpose.msra.mxu0 %v160
    %985 = vmatpush.xpose.msra.mxu0 %v128
    %986 = vmatpush.xpose.msra.mxu0 %v96
    %987 = vmatmul.f32.gmra.mxu0 %v356
    %v988 = vpop.f32.mrf.mxu0
    %v989 = vadd.f32 %v969, %v988
    %990 = vdwg.mxu0
    %991 = vmatpush.xpose.msra.mxu0 0.0
    %992 = vmatpush.xpose.msra.mxu0 0.0
    %993 = vmatpush.xpose.msra.mxu0 0.0
    %994 = vmatpush.xpose.msra.mxu0 0.0
    %995 = vmatpush.xpose.msra.mxu0 0.0
    %996 = vmatpush.xpose.msra.mxu0 0.0
    %997 = vmatpush.xpose.msra.mxu0 0.0
    %998 = vmatpush.xpose.msra.mxu0 0.0
    %999 = vmatpush.xpose.msra.mxu0 %v321
    %1000 = vmatpush.xpose.msra.mxu0 %v289
    %1001 = vmatpush.xpose.msra.mxu0 %v257
    %1002 = vmatpush.xpose.msra.mxu0 %v225
    %1003 = vmatpush.xpose.msra.mxu0 %v193
    %1004 = vmatpush.xpose.msra.mxu0 %v161
    %1005 = vmatpush.xpose.msra.mxu0 %v129
    %1006 = vmatpush.xpose.msra.mxu0 %v97
    %1007 = vmatmul.f32.gmra.mxu0 %v357
    %v1008 = vpop.f32.mrf.mxu0
    %v1009 = vadd.f32 %v989, %v1008
    %1010 = vdwg.mxu0
    %1011 = vmatpush.xpose.msra.mxu0 0.0
    %1012 = vmatpush.xpose.msra.mxu0 0.0
    %1013 = vmatpush.xpose.msra.mxu0 0.0
    %1014 = vmatpush.xpose.msra.mxu0 0.0
    %1015 = vmatpush.xpose.msra.mxu0 0.0
    %1016 = vmatpush.xpose.msra.mxu0 0.0
    %1017 = vmatpush.xpose.msra.mxu0 0.0
    %1018 = vmatpush.xpose.msra.mxu0 0.0
    %1019 = vmatpush.xpose.msra.mxu0 %v322
    %1020 = vmatpush.xpose.msra.mxu0 %v290
    %1021 = vmatpush.xpose.msra.mxu0 %v258
    %1022 = vmatpush.xpose.msra.mxu0 %v226
    %1023 = vmatpush.xpose.msra.mxu0 %v194
    %1024 = vmatpush.xpose.msra.mxu0 %v162
    %1025 = vmatpush.xpose.msra.mxu0 %v130
    %1026 = vmatpush.xpose.msra.mxu0 %v98
    %1027 = vmatmul.f32.gmra.mxu0 %v358
    %v1028 = vpop.f32.mrf.mxu0
    %v1029 = vadd.f32 %v1009, %v1028
    %1030 = vdwg.mxu0
    %v1031 = vmax.f32 %v1029, 0.0
    %v1032 = vld [vmem:[#allocation7] sm:$0xff]
    %v1033 = vld [vmem:[#allocation7 + $0x8] sm:$0xff]
    %v1034 = vld [vmem:[#allocation7 + $0x10] sm:$0xff]
    %v1035 = vld [vmem:[#allocation7 + $0x18] sm:$0xff]
    %vm1036 = vcmask 523264
    %v1038 = vsel %vm1036, %v1031, 0
    %v1041 = vsel %vm1036, %v1032, 0
    %v1044 = vsel %vm1036, %v1033, 0
    %v1047 = vsel %vm1036, %v1034, 0
    %v1050 = vsel %vm1036, %v1035, 0
    %1052 = vmatpush.xpose.msra.mxu0 0.0
    %1053 = vmatpush.xpose.msra.mxu0 0.0
    %1054 = vmatpush.xpose.msra.mxu0 0.0
    %1055 = vmatpush.xpose.msra.mxu0 0.0
    %1056 = vmatpush.xpose.msra.mxu0 0.0
    %1057 = vmatpush.xpose.msra.mxu0 0.0
    %1058 = vmatpush.xpose.msra.mxu0 0.0
    %1059 = vmatpush.xpose.msra.mxu0 0.0
    %1060 = vmatpush.xpose.msra.mxu0 0.0
    %1061 = vmatpush.xpose.msra.mxu0 0.0
    %1062 = vmatpush.xpose.msra.mxu0 0.0
    %1063 = vmatpush.xpose.msra.mxu0 0.0
    %1064 = vmatpush.xpose.msra.mxu0 %v1050
    %1065 = vmatpush.xpose.msra.mxu0 %v1047
    %1066 = vmatpush.xpose.msra.mxu0 %v1044
    %1067 = vmatpush.xpose.msra.mxu0 %v1041
    %1068 = vmatmul.f32.gmra.mxu0 %v1038
    %v1069 = vpop.f32.mrf.mxu0
    %v1070 = vadd.f32 0.0, %v1069
    %1071 = vdwg.mxu0
    %v1072 = vmax.f32 %v1070, 0.0
    %v1073 = vld [vmem:[%s3] sm:$0x1]
    %v1074 = vmul.f32 %v1072, %v1073
    %vm1075 = vcmask 253952
    %v1076 = vsel %vm1075, %v1074, 0.0
    %1077 = vadd.xlane.f32.xlu0 %v1076
    %v1078 = vpop.xlane.xlu0 %1077
    %v1079 = vmax.f32 %v1078, 0.0
    %v1080 = vand.u32 2147483647, %v1078
    %v1081 = vsub.f32 0.0, %v1080
    %v1082 = vmul.f32 %v1081, 1.442695
    %v1083 = vpow.pop %v1082
    %v1084 = vadd.f32 %v1083, 1.0
    %v1085 = vlog2.pop %v1084
    %v1086 = vmul.f32 %v1085, 0.6931472
    %v1087 = vmul.f32 -0.5, %v1083
    %v1088 = vadd.f32 %v1087, 1.0
    %v1089 = vmul.f32 %v1088, %v1083
    %v1090 = vand.u32 2147483647, %v1083
    %vm1091 = vcmp.lt.f32.partialorder %v1090, 0.0004427343
    %v1092 = vsel %vm1091, %v1089, %v1086
    %v1093 = vadd.f32 %v1079, %v1092
    %vm1094 = vcmask 0
    %1095 = vst.msk [vmem:[#allocation8] sm:$0x1] %vm1094, %v1093
    // Predicated region
    $region30: #{tpu_custom_call.1} parent=1 // pred_check
      _
    $region31: #{tpu_custom_call.1} parent=1 // pred_check_branch
      %1097 = sbr.rel (0) target = $region33
    $region32: #{tpu_custom_call.1} parent=1 // pred_region
      %1099 = vsyncadd [#allocation4], 0
      %s1101 = sshll.u32 [#allocation8], 4
      %s1102 = int_to_ptr.vmem [resolvable:$true] %s1101
      %s1103 = sshll.u32 %s4, 4
      %s1104 = int_to_ptr.hbm [resolvable:$true] %s1103
      %1106 = dma.vmem_to_hbm [thread:$0]  %s1102, 16, %s1104, [#allocation4]
    $region33: #{tpu_custom_call.1} parent=1 // pred_fallthru
      _
    // Predicated region
    $region34: #{tpu_custom_call.1} parent=1 // pred_check
      _
    $region35: #{tpu_custom_call.1} parent=1 // pred_check_branch
      %1108 = sbr.rel (0) target = $region37
    $region36: #{tpu_custom_call.1} parent=1 // pred_region
      %1110 = dma.done [#allocation4], 16
    $region37: #{tpu_custom_call.1} parent=1 // pred_fallthru
      _
    %1111 = vsyncpa [#allocation3], 1
    %1112 = vsyncpa [#allocation6], 1
    %1113 = vsyncpa [#allocation4], 1

</llo_original>
